<compile_context>
chip_gen: v7x
topology: tpu7x:2x2x1
jax: 0.10.0
libtpu: 0.0.40
codegen_flags: <defaults>
</compile_context>

<pallas_src>
import jax
import jax.numpy as jnp
import numpy as np
from jax import lax
from jax.experimental import pallas as pl
from jax.experimental.pallas import tpu as pltpu


def _pick_h_chunk(H):
    for c in (8, 4, 2, 1):
        if H % c == 0:
            return c
    return 1


def _sketchy_output_kernel(w_ref, m1_ref, m2_ref, m3_ref, mask_ref, out_ref):
    """Fused 1x1-conv (channel contraction) + masked softmax + shifted-max reduce.

    w_ref:    (3, H, L)      lane-ready conv weight (resident across the grid)
    m*_ref:   (b_tile, H, L)
    mask_ref: (b_tile, L)    binary {0, 1}
    out_ref:  (b_tile, 1)    float32
    """
    b_tile, H, L = m1_ref.shape
    hc = _pick_h_chunk(H)
    n_chunks = H // hc

    # Chunked channel contraction: accumulate a (b_tile, L) f32 partial instead of
    # materializing the full (b_tile, H, L) f32 sum-of-products (bounds live ranges,
    # keeps the VMEM working set small so b_tile can be large).
    def body(c, acc):
        off = pl.multiple_of(c * hc, hc)
        w1 = w_ref[0, pl.ds(off, hc), :][None]                      # (1, hc, L) f32
        w2 = w_ref[1, pl.ds(off, hc), :][None]
        w3 = w_ref[2, pl.ds(off, hc), :][None]
        part = (m1_ref[:, pl.ds(off, hc), :].astype(jnp.float32) * w1
                + m2_ref[:, pl.ds(off, hc), :].astype(jnp.float32) * w2
                + m3_ref[:, pl.ds(off, hc), :].astype(jnp.float32) * w3)
        return acc + jnp.sum(part, axis=1)                          # sublane reduce (XLU)

    logits = lax.fori_loop(0, n_chunks, body,
                           jnp.zeros((b_tile, L), jnp.float32))     # (b_tile, L)

    # masked_softmax tail; mask is binary so a single select replaces mul + FMA.
    mask = mask_ref[...]                                            # (b_tile, L)
    masked = jnp.where(mask != 0, logits, jnp.float32(-1e30))
    mmax = jnp.max(masked, axis=-1, keepdims=True)                  # (b_tile, 1)
    sum_e = jnp.sum(jnp.exp(masked - mmax), axis=-1, keepdims=True) # (b_tile, 1)

    # Exact identity: max_l(probs[b,l] - probs[b,0]) = (1 - exp(masked[b,0]-mmax)) / sum_e.
    # approx=False keeps full f32 accuracy (flip to True when tolerance allows; EUP slot).
    y = (1.0 - jnp.exp(masked[:, 0:1] - mmax)) * pl.reciprocal(sum_e, approx=False)
    out_ref[...] = y.astype(out_ref.dtype)


def sketchy_output(w, m1, m2, m3, mask, *, b_tile=None, pad_lanes=True):
    """w: (1, 3H); m1/m2/m3: (B, H, L); mask: (B, L) binary  ->  (B,) float32."""
    B, H, L = m1.shape
    assert m2.shape == (B, H, L) and m3.shape == (B, H, L)
    assert w.shape == (1, 3 * H)
    assert mask.shape == (B, L)

    # --- lane packing: pad L to a multiple of 128 so (.,L) rows fill vregs and DMA
    # bursts are dense.  Zero data + zero mask is semantically inert (padding is masked
    # out before the softmax).  Costs one XLA pad pass; callers with lane-aligned L
    # (or who pre-pad upstream) skip it via pad_lanes=False.
    if pad_lanes and L % 128 != 0:
        Lp = ((L + 127) // 128) * 128
        pad3 = ((0, 0), (0, 0), (0, Lp - L))
        m1 = jnp.pad(m1, pad3)
        m2 = jnp.pad(m2, pad3)
        m3 = jnp.pad(m3, pad3)
        mask = jnp.pad(mask, ((0, 0), (0, Lp - L)))
    else:
        Lp = L

    # Lane-ready weight (3, H, Lp) f32: broadcast once in the wrapper, constant
    # index_map -> DMA'd once, VMEM-resident, no in-kernel broadcasts.
    w_b = jnp.broadcast_to(w.astype(jnp.float32).reshape(3, H, 1), (3, H, Lp))

    in_item = jnp.dtype(m1.dtype).itemsize          # bf16 inputs halve HBM traffic
    mask_item = jnp.dtype(mask.dtype).itemsize      # int8/bool mask cuts its DMA 4x
    hc = _pick_h_chunk(H)

    # --- generation-aware VMEM sizing -----------------------------------------------
    try:
        vmem_cap = int(pltpu.get_tpu_info().vmem_capacity_bytes)
    except Exception:
        vmem_cap = 64 * 1024 * 1024                 # conservative fallback (v7x per-TC)
    # v5e/v6e (128 MiB physical) -> 64 MiB scoped limit; v7x (64 MiB/TC) -> 32 MiB.
    vmem_limit = int(min(vmem_cap // 2, 96 * 1024 * 1024))
    budget = int(vmem_limit * 0.75)                 # ~25% headroom for compiler scratch

    # Per-batch-row VMEM footprint:
    #   3 m inputs (double-buffered) + mask row (double-buffered) + output row
    #   + f32 working set of the chunked contraction & softmax temps (this also covers
    #     v5e's in-register bf16->f32 upcast, since the chunks are already f32).
    per_row = (3 * 2 * H * Lp * in_item
               + 2 * Lp * mask_item
               + (6 * hc + 8) * Lp * 4
               + 2 * 4)
    fixed = 2 * 3 * H * Lp * 4                      # resident broadcast weight
    if b_tile is None:
        b_tile = int(max(1, (budget - fixed) // max(per_row, 1)))
    if b_tile >= B:
        b_tile = B
    else:
        # Keep mask/out blocks sublane-dense: second-minor block dim must be a multiple
        # of 8 (or the full array dim).
        b_tile = min(max(8, (b_tile // 8) * 8), B)

    grid = (pl.cdiv(B, b_tile),)

    # TODO(synk): if the producer can hand over the already-concatenated (B, 3H, L)
    # tensor, take it as a single input (1 DMA stream/step instead of 3); and if DMA
    # latency is still exposed at small tiles, add pipeline_mode=pl.Buffered(3) to the
    # m-input BlockSpecs.
    out = pl.pallas_call(
        _sketchy_output_kernel,
        out_shape=jax.ShapeDtypeStruct((B, 1), jnp.float32),
        grid=grid,
        in_specs=[
            pl.BlockSpec((3, H, Lp), lambda b: (0, 0, 0)),        # weight: stays resident
            pl.BlockSpec((b_tile, H, Lp), lambda b: (b, 0, 0)),
            pl.BlockSpec((b_tile, H, Lp), lambda b: (b, 0, 0)),
            pl.BlockSpec((b_tile, H, Lp), lambda b: (b, 0, 0)),
            pl.BlockSpec((b_tile, Lp), lambda b: (b, 0)),         # mask: 2D, no 8x padding
        ],
        out_specs=pl.BlockSpec((b_tile, 1), lambda b: (b, 0)),    # (B,1): dense rows
        compiler_params=pltpu.CompilerParams(
            # "parallel" shards batch blocks across v7x's 2 TCs (no-op on v5e/v6e).
            # If profiling shows one v7x TC idle, switch to pltpu.CORE_PARALLEL.
            dimension_semantics=("parallel",),
            vmem_limit_bytes=vmem_limit,
        ),
    )(w_b, m1, m2, m3, mask)
    return out[:, 0]


def _reference(w, m1, m2, m3, mask):
    """Pure-JAX reference of the PyTorch forward (for correctness check)."""
    x = jnp.concatenate([m1, m2, m3], axis=1)                    # (B, 3H, L)
    logits = jnp.einsum('oh,bhl->bl', w, x)                      # (B, L)
    masked = mask * logits + (1.0 - mask) * (-1e30)
    probs = jax.nn.softmax(masked, axis=-1)
    return jnp.max(probs - probs[:, 0:1], axis=-1)


if __name__ == "__main__":
    key = jax.random.PRNGKey(0)
    B, H, L = 2, 32, 16                                          # batch, hidden_size, seq_len

    k_w, k1, k2, k3, k_len = jax.random.split(key, 5)

    # Xavier-uniform init of Conv1d(3H, 1, kernel_size=1, bias=False) weight (1, 3H, 1).
    fan_in, fan_out = 3 * H, 1
    bound = float(np.sqrt(6.0 / (fan_in + fan_out)))
    w = jax.random.uniform(k_w, (1, 3 * H), jnp.float32, minval=-bound, maxval=bound)

    m1 = jax.random.normal(k1, (B, H, L), jnp.float32)
    m2 = jax.random.normal(k2, (B, H, L), jnp.float32)
    m3 = jax.random.normal(k3, (B, H, L), jnp.float32)

    # Padding mask: 1 for valid positions, 0 for padding (binary, as required).
    lengths = jnp.array([L, L - 5], dtype=jnp.int32)
    mask = (jnp.arange(L)[None, :] < lengths[:, None]).astype(jnp.float32)   # (B, L)

    y = sketchy_output(w, m1, m2, m3, mask)
    jax.block_until_ready(y)

    y_ref = _reference(w, m1, m2, m3, mask)
    np.testing.assert_allclose(np.asarray(y), np.asarray(y_ref), rtol=1e-5, atol=1e-5)
    assert y.shape == (B,) and y.dtype == jnp.float32

    print("KERNEL_OK")
</pallas_src>

<mosaic_0001>
module attributes {stable_mosaic.version = 11 : i64} {
  func.func @_sketchy_output_kernel(%arg0: i32, %arg1: memref<3x32x128xf32, #tpu.memory_space<vmem>>, %arg2: memref<2x32x128xf32, #tpu.memory_space<vmem>>, %arg3: memref<2x32x128xf32, #tpu.memory_space<vmem>>, %arg4: memref<2x32x128xf32, #tpu.memory_space<vmem>>, %arg5: memref<2x128xf32, #tpu.memory_space<vmem>>, %arg6: memref<2x1xf32, #tpu.memory_space<vmem>>) attributes {dimension_semantics = [#tpu.dimension_semantics<parallel>], iteration_bounds = array<i64: 1>, scalar_prefetch = 0 : i64, scratch_operands = 0 : i64, tpu.core_type = #tpu.core_type<tc>, window_params = [{pipeline_mode = #tpu.pipeline_mode<synchronous>, transform_indices = @transform_0, window_bounds = array<i64: 3, 32, 128>}, {transform_indices = @transform_1, window_bounds = array<i64: 2, 32, 128>}, {transform_indices = @transform_2, window_bounds = array<i64: 2, 32, 128>}, {transform_indices = @transform_3, window_bounds = array<i64: 2, 32, 128>}, {transform_indices = @transform_4, window_bounds = array<i64: 2, 128>}, {transform_indices = @transform_5, window_bounds = array<i64: 2, 1>}]} {
    %cst = arith.constant 0.000000e+00 : f32
    %0 = vector.broadcast %cst : f32 to vector<2x128xf32>
    %c0_i32 = arith.constant 0 : i32
    %c4_i32 = arith.constant 4 : i32
    %1 = arith.addi %c0_i32, %c4_i32 : i32
    %c1_i32 = arith.constant 1 : i32
    %2 = scf.for %arg7 = %c0_i32 to %1 step %c1_i32 iter_args(%arg8 = %0) -> (vector<2x128xf32>)  : i32 {
      %c8_i32 = arith.constant 8 : i32
      %23 = arith.muli %arg7, %c8_i32 : i32
      %24 = tpu.assume_multiple %23, 8 : i32
      %c0_9 = arith.constant 0 : index
      %25 = arith.index_cast %24 : i32 to index
      %c0_10 = arith.constant 0 : index
      %26 = vector.load %arg1[%c0_9, %25, %c0_10] : memref<3x32x128xf32, #tpu.memory_space<vmem>>, vector<1x8x128xf32>
      %27 = vector.shape_cast %26 : vector<1x8x128xf32> to vector<8x128xf32>
      %28 = vector.shape_cast %27 : vector<8x128xf32> to vector<1x8x128xf32>
      %c1 = arith.constant 1 : index
      %29 = arith.index_cast %24 : i32 to index
      %c0_11 = arith.constant 0 : index
      %30 = vector.load %arg1[%c1, %29, %c0_11] : memref<3x32x128xf32, #tpu.memory_space<vmem>>, vector<1x8x128xf32>
      %31 = vector.shape_cast %30 : vector<1x8x128xf32> to vector<8x128xf32>
      %32 = vector.shape_cast %31 : vector<8x128xf32> to vector<1x8x128xf32>
      %c2 = arith.constant 2 : index
      %33 = arith.index_cast %24 : i32 to index
      %c0_12 = arith.constant 0 : index
      %34 = vector.load %arg1[%c2, %33, %c0_12] : memref<3x32x128xf32, #tpu.memory_space<vmem>>, vector<1x8x128xf32>
      %35 = vector.shape_cast %34 : vector<1x8x128xf32> to vector<8x128xf32>
      %36 = vector.shape_cast %35 : vector<8x128xf32> to vector<1x8x128xf32>
      %c0_13 = arith.constant 0 : index
      %37 = arith.index_cast %24 : i32 to index
      %c0_14 = arith.constant 0 : index
      %38 = vector.load %arg2[%c0_13, %37, %c0_14] : memref<2x32x128xf32, #tpu.memory_space<vmem>>, vector<2x8x128xf32>
      %39 = vector.broadcast %28 : vector<1x8x128xf32> to vector<2x8x128xf32>
      %40 = arith.mulf %38, %39 : vector<2x8x128xf32>
      %c0_15 = arith.constant 0 : index
      %41 = arith.index_cast %24 : i32 to index
      %c0_16 = arith.constant 0 : index
      %42 = vector.load %arg3[%c0_15, %41, %c0_16] : memref<2x32x128xf32, #tpu.memory_space<vmem>>, vector<2x8x128xf32>
      %43 = vector.broadcast %32 : vector<1x8x128xf32> to vector<2x8x128xf32>
      %44 = arith.mulf %42, %43 : vector<2x8x128xf32>
      %45 = arith.addf %40, %44 : vector<2x8x128xf32>
      %c0_17 = arith.constant 0 : index
      %46 = arith.index_cast %24 : i32 to index
      %c0_18 = arith.constant 0 : index
      %47 = vector.load %arg4[%c0_17, %46, %c0_18] : memref<2x32x128xf32, #tpu.memory_space<vmem>>, vector<2x8x128xf32>
      %48 = vector.broadcast %36 : vector<1x8x128xf32> to vector<2x8x128xf32>
      %49 = arith.mulf %47, %48 : vector<2x8x128xf32>
      %50 = arith.addf %45, %49 : vector<2x8x128xf32>
      %cst_19 = arith.constant dense<0.000000e+00> : vector<2x128xf32>
      %51 = vector.multi_reduction <add>, %50, %cst_19 [1] : vector<2x8x128xf32> to vector<2x128xf32>
      %52 = arith.addf %arg8, %51 : vector<2x128xf32>
      scf.yield %52 : vector<2x128xf32>
    }
    %c4_i32_0 = arith.constant 4 : i32
    %c0 = arith.constant 0 : index
    %c0_1 = arith.constant 0 : index
    %3 = vector.load %arg5[%c0, %c0_1] : memref<2x128xf32, #tpu.memory_space<vmem>>, vector<2x128xf32>
    %cst_2 = arith.constant 0.000000e+00 : f32
    %4 = vector.broadcast %cst_2 : f32 to vector<2x128xf32>
    %5 = arith.cmpf one, %3, %4 : vector<2x128xf32>
    %cst_3 = arith.constant -1.000000e+30 : f32
    %6 = vector.broadcast %cst_3 : f32 to vector<2x128xf32>
    %7 = arith.select %5, %2, %6 : vector<2x128xi1>, vector<2x128xf32>
    %cst_4 = arith.constant dense<0xFF800000> : vector<2xf32>
    %8 = vector.multi_reduction <maximumf>, %7, %cst_4 [1] : vector<2x128xf32> to vector<2xf32>
    %9 = vector.shape_cast %8 : vector<2xf32> to vector<2x1xf32>
    %10 = vector.broadcast %9 : vector<2x1xf32> to vector<2x128xf32>
    %11 = arith.subf %7, %10 : vector<2x128xf32>
    %12 = math.exp %11 : vector<2x128xf32>
    %cst_5 = arith.constant dense<0.000000e+00> : vector<2xf32>
    %13 = vector.multi_reduction <add>, %12, %cst_5 [1] : vector<2x128xf32> to vector<2xf32>
    %14 = vector.shape_cast %13 : vector<2xf32> to vector<2x1xf32>
    %15 = vector.extract_strided_slice %7 {offsets = [0, 0], sizes = [2, 1], strides = [1, 1]} : vector<2x128xf32> to vector<2x1xf32>
    %16 = arith.subf %15, %9 : vector<2x1xf32>
    %17 = math.exp %16 : vector<2x1xf32>
    %cst_6 = arith.constant 1.000000e+00 : f32
    %18 = vector.broadcast %cst_6 : f32 to vector<2x1xf32>
    %19 = arith.subf %18, %17 : vector<2x1xf32>
    %20 = tpu.reciprocal %14 : vector<2x1xf32> -> vector<2x1xf32>
    %21 = arith.mulf %19, %20 : vector<2x1xf32>
    %c0_7 = arith.constant 0 : index
    %c0_8 = arith.constant 0 : index
    %22 = vector.load %arg6[%c0_7, %c0_8] : memref<2x1xf32, #tpu.memory_space<vmem>>, vector<2x1xf32>
    tpu.vector_store %arg6[%c0_7, %c0_8], %21 {strides = array<i32>} : memref<2x1xf32, #tpu.memory_space<vmem>>, vector<2x1xf32>,
    return
  }
  func.func @transform_0(%arg0: i32) -> (i32, i32, i32) {
    %c0_i32 = arith.constant 0 : i32
    %c0_i32_0 = arith.constant 0 : i32
    %c0_i32_1 = arith.constant 0 : i32
    %c0_i32_2 = arith.constant 0 : i32
    return %c0_i32, %c0_i32_0, %c0_i32_1 : i32, i32, i32
  }
  func.func @transform_1(%arg0: i32) -> (i32, i32, i32) {
    %c0_i32 = arith.constant 0 : i32
    %c0_i32_0 = arith.constant 0 : i32
    %c0_i32_1 = arith.constant 0 : i32
    return %arg0, %c0_i32, %c0_i32_0 : i32, i32, i32
  }
  func.func @transform_2(%arg0: i32) -> (i32, i32, i32) {
    %c0_i32 = arith.constant 0 : i32
    %c0_i32_0 = arith.constant 0 : i32
    %c0_i32_1 = arith.constant 0 : i32
    return %arg0, %c0_i32, %c0_i32_0 : i32, i32, i32
  }
  func.func @transform_3(%arg0: i32) -> (i32, i32, i32) {
    %c0_i32 = arith.constant 0 : i32
    %c0_i32_0 = arith.constant 0 : i32
    %c0_i32_1 = arith.constant 0 : i32
    return %arg0, %c0_i32, %c0_i32_0 : i32, i32, i32
  }
  func.func @transform_4(%arg0: i32) -> (i32, i32) {
    %c0_i32 = arith.constant 0 : i32
    %c0_i32_0 = arith.constant 0 : i32
    return %arg0, %c0_i32 : i32, i32
  }
  func.func @transform_5(%arg0: i32) -> (i32, i32) {
    %c0_i32 = arith.constant 0 : i32
    %c0_i32_0 = arith.constant 0 : i32
    return %arg0, %c0_i32 : i32, i32
  }
}

</mosaic_0001>

<llo_original>
// kernel: tpu_custom_call.1
$region0: #{tpu_custom_call.1}
  #allocation0 [shape = 'u32[]', space=smem, size = 0x4, offset = 0x4, fixed_abs, tag = 'smem constant byte address 0x4 - core index']
  #allocation1 [shape = 'u32[144,128]{1,0:T(1,128)}', space=vmem, size = 0x12000, scoped, tag = 'internal scratch']
  %s0 = inlined_call_operand.hbm [shape: f32[3,32,128], index: 0, kind: input, shape index: {}]
  %s1 = inlined_call_operand.hbm [shape: f32[2,32,128], index: 1, kind: input, shape index: {}]
  %s2 = inlined_call_operand.hbm [shape: f32[2,32,128], index: 2, kind: input, shape index: {}]
  %s3 = inlined_call_operand.hbm [shape: f32[2,32,128], index: 3, kind: input, shape index: {}]
  %s4 = inlined_call_operand.vmem [shape: f32[2,128], index: 4, kind: input, shape index: {}]
  %s5 = inlined_call_operand.vmem [shape: f32[2,1], index: 5, kind: output, shape index: {}]
  %s6 = sld [smem:[#allocation0]]
  $region53: #{tpu_custom_call.1} parent=0
    _
  %s8 = ssub.s32 1, %s6
  %s9 = scalar_select 0, %s8, %s6
  $region1: #{tpu_custom_call.1} parent=0
    #allocation2 [shape = 'u8[49152]{0}', space=vmem, size = 0xc000, scoped, tag = 'input window, operand 0, single buffered']
    #allocation3 [shape = 's32[1]{0}', space=sflag, size = 0x4, scoped, tag = 'scoped memory for tpu_custom_call.1']
    #allocation4 [shape = 'u8[32768]{0}', space=vmem, size = 0x8000, scoped, tag = 'input window, operand 1, single buffered']
    #allocation5 [shape = 's32[1]{0}', space=sflag, size = 0x4, scoped, tag = 'scoped memory for tpu_custom_call.1']
    #allocation6 [shape = 'u8[32768]{0}', space=vmem, size = 0x8000, scoped, tag = 'input window, operand 2, single buffered']
    #allocation7 [shape = 'u8[32768]{0}', space=vmem, size = 0x8000, scoped, tag = 'input window, operand 3, single buffered']
    #allocation8 [shape = 's32[1]{0}', space=sflag, size = 0x4, scoped, tag = 'scoped memory for tpu_custom_call.1']
    %10 = vsyncpa [#allocation3], 0
    %11 = vsyncpa [#allocation5], 0
    %12 = vsyncpa [#allocation8], 0
    // Predicated region
    $region2: #{tpu_custom_call.1} parent=1 // pred_check
      _
    $region3: #{tpu_custom_call.1} parent=1 // pred_check_branch
      %14 = sbr.rel (0) target = $region5
    $region4: #{tpu_custom_call.1} parent=1 // pred_region
      %s16 = ssub.s32 1536, 1536
      %17 = vsyncadd [#allocation3], %s16
      %s18 = sshll.u32 [#allocation2], 4
      %s19 = int_to_ptr.vmem [resolvable:$true] %s18
      %24 = dma.hbm_to_vmem [thread:$0]  %s0, 1536, %s19, [#allocation3], 128, 128, 8
    $region5: #{tpu_custom_call.1} parent=1 // pred_fallthru
      _
    // Predicated region
    $region6: #{tpu_custom_call.1} parent=1 // pred_check
      _
    $region7: #{tpu_custom_call.1} parent=1 // pred_check_branch
      %26 = sbr.rel (0) target = $region9
    $region8: #{tpu_custom_call.1} parent=1 // pred_region
      %s28 = ssub.s32 1024, 1024
      %29 = vsyncadd [#allocation5], %s28
      %s30 = sshll.u32 [#allocation4], 4
      %s31 = int_to_ptr.vmem [resolvable:$true] %s30
      %36 = dma.hbm_to_vmem [thread:$0]  %s1, 1024, %s31, [#allocation5], 128, 128, 8
    $region9: #{tpu_custom_call.1} parent=1 // pred_fallthru
      _
    // Predicated region
    $region10: #{tpu_custom_call.1} parent=1 // pred_check
      _
    $region11: #{tpu_custom_call.1} parent=1 // pred_check_branch
      %38 = sbr.rel (0) target = $region13
    $region12: #{tpu_custom_call.1} parent=1 // pred_region
      %s40 = ssub.s32 1024, 1024
      %41 = vsyncadd [#allocation5], %s40
      %s42 = sshll.u32 [#allocation6], 4
      %s43 = int_to_ptr.vmem [resolvable:$true] %s42
      %48 = dma.hbm_to_vmem [thread:$0]  %s2, 1024, %s43, [#allocation5], 128, 128, 8
    $region13: #{tpu_custom_call.1} parent=1 // pred_fallthru
      _
    // Predicated region
    $region14: #{tpu_custom_call.1} parent=1 // pred_check
      _
    $region15: #{tpu_custom_call.1} parent=1 // pred_check_branch
      %50 = sbr.rel (0) target = $region17
    $region16: #{tpu_custom_call.1} parent=1 // pred_region
      %s52 = ssub.s32 1024, 1024
      %53 = vsyncadd [#allocation8], %s52
      %s54 = sshll.u32 [#allocation7], 4
      %s55 = int_to_ptr.vmem [resolvable:$true] %s54
      %60 = dma.hbm_to_vmem [thread:$0]  %s3, 1024, %s55, [#allocation8], 128, 128, 8
    $region17: #{tpu_custom_call.1} parent=1 // pred_fallthru
      _
    // Predicated region
    $region18: #{tpu_custom_call.1} parent=1 // pred_check
      _
    $region19: #{tpu_custom_call.1} parent=1 // pred_check_branch
      %62 = sbr.rel (0) target = $region21
    $region20: #{tpu_custom_call.1} parent=1 // pred_region
      _
    $region21: #{tpu_custom_call.1} parent=1 // pred_fallthru
      _
    // Predicated region
    $region22: #{tpu_custom_call.1} parent=1 // pred_check
      _
    $region23: #{tpu_custom_call.1} parent=1 // pred_check_branch
      %64 = sbr.rel (0) target = $region25
    $region24: #{tpu_custom_call.1} parent=1 // pred_region
      %65 = dma.done [#allocation3], 1536
    $region25: #{tpu_custom_call.1} parent=1 // pred_fallthru
      _
    // Predicated region
    $region26: #{tpu_custom_call.1} parent=1 // pred_check
      _
    $region27: #{tpu_custom_call.1} parent=1 // pred_check_branch
      %67 = sbr.rel (0) target = $region29
    $region28: #{tpu_custom_call.1} parent=1 // pred_region
      %68 = dma.done [#allocation5], 1024
    $region29: #{tpu_custom_call.1} parent=1 // pred_fallthru
      _
    // Predicated region
    $region30: #{tpu_custom_call.1} parent=1 // pred_check
      _
    $region31: #{tpu_custom_call.1} parent=1 // pred_check_branch
      %70 = sbr.rel (0) target = $region33
    $region32: #{tpu_custom_call.1} parent=1 // pred_region
      %71 = dma.done [#allocation5], 1024
    $region33: #{tpu_custom_call.1} parent=1 // pred_fallthru
      _
    // Predicated region
    $region34: #{tpu_custom_call.1} parent=1 // pred_check
      _
    $region35: #{tpu_custom_call.1} parent=1 // pred_check_branch
      %73 = sbr.rel (0) target = $region37
    $region36: #{tpu_custom_call.1} parent=1 // pred_region
      %74 = dma.done [#allocation8], 1024
    $region37: #{tpu_custom_call.1} parent=1 // pred_fallthru
      _
    loop: start=0, step=1, limit=4
    $region38: #{tpu_custom_call.1} parent=1 // loop_pre_header
      _
    $region39: #{tpu_custom_call.1} parent=1 // loop_header
      %s76 = sphi 0, %s80
      %p77 = scmp.ge.s32.totalorder %s76, 4
      %v81 = vphi 0.0, %v123
      %v82 = vphi 0.0, %v124
    $region40: #{tpu_custom_call.1} parent=1 // loop_header_branch
      %79 = sbr.rel (%p77) target = $region44
    $region41: #{tpu_custom_call.1} parent=1 // loop_body
      %s83 = smul.u32 %s76, 8
      %s84 = scalar_lea.vmem [#allocation2], %s83
      %v85 = vld [vmem:[%s84] sm:$0xff]
      %s86 = sadd.s32 %s83, 32
      %s87 = scalar_lea.vmem [#allocation2], %s86
      %v88 = vld [vmem:[%s87] sm:$0xff]
      %s89 = sadd.s32 %s83, 64
      %s90 = scalar_lea.vmem [#allocation2], %s89
      %v91 = vld [vmem:[%s90] sm:$0xff]
      %s92 = scalar_lea.vmem [#allocation4], %s83
      %v93 = vld [vmem:[%s92] sm:$0xff]
      %v94 = vld [vmem:[%s92 + $0x20] sm:$0xff]
      %v95 = vmul.f32 %v93, %v85
      %v96 = vmul.f32 %v94, %v85
      %s97 = scalar_lea.vmem [#allocation6], %s83
      %v98 = vld [vmem:[%s97] sm:$0xff]
      %v99 = vld [vmem:[%s97 + $0x20] sm:$0xff]
      %v100 = vmul.f32 %v98, %v88
      %v101 = vmul.f32 %v99, %v88
      %v102 = vadd.f32 %v95, %v100
      %v103 = vadd.f32 %v96, %v101
      %s104 = scalar_lea.vmem [#allocation7], %s83
      %v105 = vld [vmem:[%s104] sm:$0xff]
      %v106 = vld [vmem:[%s104 + $0x20] sm:$0xff]
      %v107 = vmul.f32 %v105, %v91
      %v108 = vmul.f32 %v106, %v91
      %v109 = vadd.f32 %v102, %v107
      %v110 = vadd.f32 %v103, %v108
      %v111 = vrot.slane %v109, 4
      %v112 = vadd.f32 %v109, %v111
      %v113 = vrot.slane %v112, 2
      %v114 = vadd.f32 %v112, %v113
      %v115 = vrot.slane %v114, 1
      %v116 = vadd.f32 %v114, %v115
      %v117 = vrot.slane %v110, 4
      %v118 = vadd.f32 %v110, %v117
      %v119 = vrot.slane %v118, 2
      %v120 = vadd.f32 %v118, %v119
      %v121 = vrot.slane %v120, 1
      %v122 = vadd.f32 %v120, %v121
      %v123 = vadd.f32 %v81, %v116
      %v124 = vadd.f32 %v82, %v122
    $region42: #{tpu_custom_call.1} parent=1 // loop_footer
      %s80 = sadd.s32 1, %s76
    $region43: #{tpu_custom_call.1} parent=1 // loop_footer_branch
      %75 = sbr.rel target = $region39
    $region44: #{tpu_custom_call.1} parent=1 // loop_exit
      _
    %v125 = vld [vmem:[%s4] sm:$0x3]
    %vm126 = vcmp.ne.f32.partialorder %v125, 0.0
    %vm129 = vcmask 1041409
    %v130 = vsel %vm129, %v82, %v81
    %v132 = vsel %vm126, %v130, -1e+30
    %vm133 = vcmask 1041408
    %v134 = vsel %vm133, %v132, -inf
    %135 = vmax.xlane.f32.xlu0 %v134
    %v136 = vpop.xlane.xlu0 %135
    %v137 = vsub.f32 %v132, %v136
    %v138 = vmul.f32 %v137, 1.442695
    %v139 = vpow.pop %v138
    %v140 = vsel %vm133, %v139, 0.0
    %141 = vadd.xlane.f32.xlu0 %v140
    %v142 = vpop.xlane.xlu0 %141
    %v143 = vsub.f32 1.0, %v139
    %v144 = vrcp.pop %v142
    %v145 = vmul.f32 %v143, %v144
    %vm146 = vcmask 1024
    %147 = vst.msk [vmem:[%s5] sm:$0x3] %vm146, %v145
    // Predicated region
    $region45: #{tpu_custom_call.1} parent=1 // pred_check
      _
    $region46: #{tpu_custom_call.1} parent=1 // pred_check_branch
      %149 = sbr.rel (0) target = $region48
    $region47: #{tpu_custom_call.1} parent=1 // pred_region
      _
    $region48: #{tpu_custom_call.1} parent=1 // pred_fallthru
      _
    // Predicated region
    $region49: #{tpu_custom_call.1} parent=1 // pred_check
      _
    $region50: #{tpu_custom_call.1} parent=1 // pred_check_branch
      %151 = sbr.rel (0) target = $region52
    $region51: #{tpu_custom_call.1} parent=1 // pred_region
      _
    $region52: #{tpu_custom_call.1} parent=1 // pred_fallthru
      _
    %152 = vsyncpa [#allocation3], 1
    %153 = vsyncpa [#allocation5], 1
    %154 = vsyncpa [#allocation8], 1

</llo_original>
